<compile_context>
chip_gen: v5e
topology: v5e:2x2
jax: 0.10.0
libtpu: 0.0.40
codegen_flags: <defaults>
</compile_context>

<pallas_src>
import jax
import jax.numpy as jnp
from jax.experimental import pallas as pl
from jax.experimental.pallas import tpu as pltpu


_LANE = 128     # vreg lane width
_SUBLANE = 8    # vreg sublane count (f32)


def _round_up(x, m):
    return (x + m - 1) // m * m


def _two_nn_kernel(x_ref, w1_ref, b1_ref, w2_ref, b2_ref, o_ref):
    # fc1: [TB, D_in] @ [D_in, Hp] -> f32 accumulation on the MXU.
    h = jnp.dot(x_ref[...], w1_ref[...], preferred_element_type=jnp.float32)
    h = h + b1_ref[...]          # f32 bias epilogue (VPU)
    h = jnp.maximum(h, 0.0)      # ReLU in f32
    # Intentional downcast of hidden activations to the weight dtype so the
    # second matmul runs at the MXU's native (e.g. bf16) rate; accumulation
    # remains f32 via preferred_element_type.
    out = jnp.dot(h.astype(w2_ref.dtype), w2_ref[...],
                  preferred_element_type=jnp.float32)
    out = out + b2_ref[...]      # f32 bias epilogue
    o_ref[...] = out.astype(o_ref.dtype)


def two_nn_forward(x, w1, b1, w2, b2, *, tile_b=256, compute_dtype=None,
                   vmem_ceiling_bytes=64 * 1024 * 1024):
    """Fused TwoNN forward pass.

    x  : [B, D_in]
    w1 : [D_in, H]   (transpose of PyTorch fc1.weight)
    b1 : [H]
    w2 : [H, D_out]  (transpose of PyTorch fc2.weight)
    b2 : [D_out]
    compute_dtype: optional operand dtype for the matmuls (e.g. jnp.bfloat16);
                   accumulation and bias/ReLU epilogues stay f32.
    returns [B, D_out] in x's original dtype.
    """
    B, D_in = x.shape
    D_in_w, H = w1.shape
    H_w, D_out = w2.shape
    assert D_in_w == D_in and H_w == H and b1.shape == (H,) and b2.shape == (D_out,)

    out_dtype = x.dtype
    if compute_dtype is not None:
        x = x.astype(compute_dtype)
        w1 = w1.astype(compute_dtype)
        w2 = w2.astype(compute_dtype)
    # Biases are added to the f32 accumulator -> keep them f32 on every chip
    # (v5e has no bf16 VPU path).
    b1 = b1.astype(jnp.float32)
    b2 = b2.astype(jnp.float32)

    # --- Lane-dense padding of hidden / output widths (multiples of 128). ---
    H_pad = _round_up(H, _LANE)
    D_out_pad = _round_up(D_out, _LANE)
    if H_pad != H:
        w1 = jnp.pad(w1, ((0, 0), (0, H_pad - H)))
        b1 = jnp.pad(b1, (0, H_pad - H))
        w2 = jnp.pad(w2, ((0, H_pad - H), (0, 0)))
    if D_out_pad != D_out:
        w2 = jnp.pad(w2, ((0, 0), (0, D_out_pad - D_out)))
        b2 = jnp.pad(b2, (0, D_out_pad - D_out))

    # --- Batch tiling (parallel grid axis). ---
    tile_b = max(_SUBLANE, _round_up(min(tile_b, B), _SUBLANE))

    in_itemsize = jnp.dtype(x.dtype).itemsize
    out_itemsize = jnp.dtype(out_dtype).itemsize

    def _vmem_bytes(tb):
        # BlockSpec double-buffers every operand (weights too, even though
        # their block index is constant across the grid).
        x_bytes = tb * D_in * in_itemsize
        o_bytes = tb * D_out_pad * out_itemsize
        w_bytes = (D_in * H_pad + H_pad * D_out_pad) * in_itemsize
        b_bytes = (H_pad + D_out_pad) * 4
        return 2 * (x_bytes + o_bytes + w_bytes + b_bytes)

    # Shrink the batch tile until buffers fit comfortably in the VMEM ceiling
    # (half the ceiling leaves headroom for compute intermediates / spills).
    while tile_b > _SUBLANE and _vmem_bytes(tile_b) > vmem_ceiling_bytes // 2:
        tile_b = _round_up(max(_SUBLANE, tile_b // 2), _SUBLANE)

    B_pad = _round_up(B, tile_b)
    if B_pad != B:
        x = jnp.pad(x, ((0, B_pad - B), (0, 0)))
    grid_b = B_pad // tile_b

    # Explicit scoped-VMEM limit: big enough for our buffers, never above the
    # smallest physical VMEM we target (v7x: 64 MiB per TensorCore).
    vmem_limit = int(min(vmem_ceiling_bytes,
                         max(_vmem_bytes(tile_b) + (4 << 20), 32 << 20)))

    out_padded = pl.pallas_call(
        _two_nn_kernel,
        out_shape=jax.ShapeDtypeStruct((B_pad, D_out_pad), out_dtype),
        grid_spec=pltpu.PrefetchScalarGridSpec(
            num_scalar_prefetch=0,
            grid=(grid_b,),
            in_specs=[
                pl.BlockSpec((tile_b, D_in), lambda i: (i, 0)),     # x tile
                pl.BlockSpec((D_in, H_pad), lambda i: (0, 0)),      # w1 (resident)
                pl.BlockSpec((1, H_pad), lambda i: (0, 0)),         # b1 (resident)
                pl.BlockSpec((H_pad, D_out_pad), lambda i: (0, 0)), # w2 (resident)
                pl.BlockSpec((1, D_out_pad), lambda i: (0, 0)),     # b2 (resident)
            ],
            out_specs=pl.BlockSpec((tile_b, D_out_pad), lambda i: (i, 0)),
        ),
        compiler_params=pltpu.CompilerParams(
            dimension_semantics=("parallel",),   # megacore-shard batch on v7x
            vmem_limit_bytes=vmem_limit,
        ),
    )(x, w1, b1.reshape(1, H_pad), w2, b2.reshape(1, D_out_pad))

    return out_padded[:B, :D_out]


def init_two_nn_params(key, input_dim, hidden_outdim, output_dim,
                       dtype=jnp.float32):
    """Deterministic init mimicking PyTorch nn.Linear default U(-1/sqrt(fan_in), +)."""
    k1, k2, k3, k4 = jax.random.split(key, 4)
    bound1 = 1.0 / (input_dim ** 0.5)
    bound2 = 1.0 / (hidden_outdim ** 0.5)
    # Stored pre-transposed relative to PyTorch: [in, out].
    w1 = jax.random.uniform(k1, (input_dim, hidden_outdim), dtype,
                            minval=-bound1, maxval=bound1)
    b1 = jax.random.uniform(k2, (hidden_outdim,), dtype,
                            minval=-bound1, maxval=bound1)
    w2 = jax.random.uniform(k3, (hidden_outdim, output_dim), dtype,
                            minval=-bound2, maxval=bound2)
    b2 = jax.random.uniform(k4, (output_dim,), dtype,
                            minval=-bound2, maxval=bound2)
    return w1, b1, w2, b2


if __name__ == "__main__":
    key = jax.random.PRNGKey(0)
    kx, kp = jax.random.split(key)

    # Small shapes implied by the module: x is [batch, input_dim].
    batch, input_dim, hidden_outdim, output_dim = 8, 64, 32, 16

    x = jax.random.normal(kx, (batch, input_dim), dtype=jnp.float32)
    w1, b1, w2, b2 = init_two_nn_params(kp, input_dim, hidden_outdim, output_dim)

    # Pure-JAX reference.
    ref = jnp.maximum(x @ w1 + b1, 0.0) @ w2 + b2

    # f32 path: exact check.
    out = two_nn_forward(x, w1, b1, w2, b2)
    out = jax.block_until_ready(out)
    assert out.shape == (batch, output_dim)
    assert jnp.allclose(out, ref, atol=1e-5, rtol=1e-5)

    # bf16-operand path (MXU-rate path on v6e/v7x), f32 accumulation.
    out_bf16 = two_nn_forward(x, w1, b1, w2, b2, compute_dtype=jnp.bfloat16)
    out_bf16 = jax.block_until_ready(out_bf16)
    assert out_bf16.shape == (batch, output_dim)
    assert jnp.allclose(out_bf16.astype(jnp.float32), ref, atol=5e-2, rtol=5e-2)

    print("KERNEL_OK")
</pallas_src>

<mosaic_0001>
module attributes {stable_mosaic.version = 11 : i64} {
  func.func @_two_nn_kernel(%arg0: i32, %arg1: memref<8x64xf32, #tpu.memory_space<vmem>>, %arg2: memref<64x128xf32, #tpu.memory_space<vmem>>, %arg3: memref<1x128xf32, #tpu.memory_space<vmem>>, %arg4: memref<128x128xf32, #tpu.memory_space<vmem>>, %arg5: memref<1x128xf32, #tpu.memory_space<vmem>>, %arg6: memref<8x128xf32, #tpu.memory_space<vmem>>) attributes {dimension_semantics = [#tpu.dimension_semantics<parallel>], iteration_bounds = array<i64: 1>, scalar_prefetch = 0 : i64, scratch_operands = 0 : i64, tpu.core_type = #tpu.core_type<tc>, window_params = [{transform_indices = @transform_0, window_bounds = array<i64: 8, 64>}, {pipeline_mode = #tpu.pipeline_mode<synchronous>, transform_indices = @transform_1, window_bounds = array<i64: 64, 128>}, {pipeline_mode = #tpu.pipeline_mode<synchronous>, transform_indices = @transform_2, window_bounds = array<i64: 1, 128>}, {pipeline_mode = #tpu.pipeline_mode<synchronous>, transform_indices = @transform_3, window_bounds = array<i64: 128, 128>}, {pipeline_mode = #tpu.pipeline_mode<synchronous>, transform_indices = @transform_4, window_bounds = array<i64: 1, 128>}, {transform_indices = @transform_5, window_bounds = array<i64: 8, 128>}]} {
    %c0 = arith.constant 0 : index
    %c0_0 = arith.constant 0 : index
    %0 = vector.load %arg1[%c0, %c0_0] : memref<8x64xf32, #tpu.memory_space<vmem>>, vector<8x64xf32>
    %c0_1 = arith.constant 0 : index
    %c0_2 = arith.constant 0 : index
    %1 = vector.load %arg2[%c0_1, %c0_2] : memref<64x128xf32, #tpu.memory_space<vmem>>, vector<64x128xf32>
    %cst = arith.constant dense<0.000000e+00> : vector<8x128xf32>
    %2 = tpu.matmul %0, %1, %cst {dimension_numbers = #tpu.dot_dimension_numbers<[1], [0], [0], [1], [0, 0, 1, 1], [], []>} : vector<8x64xf32>, vector<64x128xf32>, vector<8x128xf32> -> vector<8x128xf32>
    %c0_3 = arith.constant 0 : index
    %c0_4 = arith.constant 0 : index
    %3 = vector.load %arg3[%c0_3, %c0_4] : memref<1x128xf32, #tpu.memory_space<vmem>>, vector<1x128xf32>
    %4 = vector.broadcast %3 : vector<1x128xf32> to vector<8x128xf32>
    %5 = arith.addf %2, %4 : vector<8x128xf32>
    %cst_5 = arith.constant 0.000000e+00 : f32
    %6 = vector.broadcast %cst_5 : f32 to vector<8x128xf32>
    %7 = arith.maximumf %5, %6 : vector<8x128xf32>
    %c0_6 = arith.constant 0 : index
    %c0_7 = arith.constant 0 : index
    %8 = vector.load %arg4[%c0_6, %c0_7] : memref<128x128xf32, #tpu.memory_space<vmem>>, vector<128x128xf32>
    %cst_8 = arith.constant dense<0.000000e+00> : vector<8x128xf32>
    %9 = tpu.matmul %7, %8, %cst_8 {dimension_numbers = #tpu.dot_dimension_numbers<[1], [0], [0], [1], [0, 0, 1, 1], [], []>} : vector<8x128xf32>, vector<128x128xf32>, vector<8x128xf32> -> vector<8x128xf32>
    %c0_9 = arith.constant 0 : index
    %c0_10 = arith.constant 0 : index
    %10 = vector.load %arg5[%c0_9, %c0_10] : memref<1x128xf32, #tpu.memory_space<vmem>>, vector<1x128xf32>
    %11 = vector.broadcast %10 : vector<1x128xf32> to vector<8x128xf32>
    %12 = arith.addf %9, %11 : vector<8x128xf32>
    %c0_11 = arith.constant 0 : index
    %c0_12 = arith.constant 0 : index
    %13 = vector.load %arg6[%c0_11, %c0_12] : memref<8x128xf32, #tpu.memory_space<vmem>>, vector<8x128xf32>
    tpu.vector_store %arg6[%c0_11, %c0_12], %12 {strides = array<i32>} : memref<8x128xf32, #tpu.memory_space<vmem>>, vector<8x128xf32>,
    return
  }
  func.func @transform_0(%arg0: i32) -> (i32, i32) {
    %c0_i32 = arith.constant 0 : i32
    %c0_i32_0 = arith.constant 0 : i32
    return %arg0, %c0_i32 : i32, i32
  }
  func.func @transform_1(%arg0: i32) -> (i32, i32) {
    %c0_i32 = arith.constant 0 : i32
    %c0_i32_0 = arith.constant 0 : i32
    %c0_i32_1 = arith.constant 0 : i32
    return %c0_i32, %c0_i32_0 : i32, i32
  }
  func.func @transform_2(%arg0: i32) -> (i32, i32) {
    %c0_i32 = arith.constant 0 : i32
    %c0_i32_0 = arith.constant 0 : i32
    %c0_i32_1 = arith.constant 0 : i32
    return %c0_i32, %c0_i32_0 : i32, i32
  }
  func.func @transform_3(%arg0: i32) -> (i32, i32) {
    %c0_i32 = arith.constant 0 : i32
    %c0_i32_0 = arith.constant 0 : i32
    %c0_i32_1 = arith.constant 0 : i32
    return %c0_i32, %c0_i32_0 : i32, i32
  }
  func.func @transform_4(%arg0: i32) -> (i32, i32) {
    %c0_i32 = arith.constant 0 : i32
    %c0_i32_0 = arith.constant 0 : i32
    %c0_i32_1 = arith.constant 0 : i32
    return %c0_i32, %c0_i32_0 : i32, i32
  }
  func.func @transform_5(%arg0: i32) -> (i32, i32) {
    %c0_i32 = arith.constant 0 : i32
    %c0_i32_0 = arith.constant 0 : i32
    return %arg0, %c0_i32 : i32, i32
  }
}

</mosaic_0001>

<llo_original>
// kernel: tpu_custom_call.1
$region0: #{tpu_custom_call.1}
  #allocation0 [shape = 'u32[]', space=smem, size = 0x4, offset = 0x4, fixed_abs, tag = 'smem constant byte address 0x4 - core index']
  #allocation1 [shape = 'u32[72,128]{1,0:T(1,128)}', space=vmem, size = 0x9000, scoped, tag = 'internal scratch']
  %s0 = inlined_call_operand.hbm [shape: f32[8,64], index: 0, kind: input, shape index: {}]
  %s1 = inlined_call_operand.hbm [shape: f32[64,128], index: 1, kind: input, shape index: {}]
  %s2 = inlined_call_operand.vmem [shape: f32[1,128], index: 2, kind: input, shape index: {}]
  %s3 = inlined_call_operand.hbm [shape: f32[128,128], index: 3, kind: input, shape index: {}]
  %s4 = inlined_call_operand.vmem [shape: f32[1,128], index: 4, kind: input, shape index: {}]
  %s5 = inlined_call_operand.hbm [shape: f32[8,128], index: 5, kind: output, shape index: {}]
  %s6 = sld [smem:[#allocation0]]
  $region42: #{tpu_custom_call.1} parent=0
    _
  %s8 = ssub.s32 1, %s6
  %s9 = scalar_select 0, %s8, %s6
  $region1: #{tpu_custom_call.1} parent=0
    #allocation2 [shape = 'u8[4096]{0}', space=vmem, size = 0x1000, scoped, tag = 'input window, operand 0, single buffered']
    #allocation3 [shape = 's32[1]{0}', space=sflag, size = 0x4, scoped, tag = 'scoped memory for tpu_custom_call.1']
    #allocation4 [shape = 's32[1]{0}', space=sflag, size = 0x4, scoped, tag = 'scoped memory for tpu_custom_call.1']
    #allocation5 [shape = 'u8[32768]{0}', space=vmem, size = 0x8000, scoped, tag = 'input window, operand 1, single buffered']
    #allocation6 [shape = 's32[1]{0}', space=sflag, size = 0x4, scoped, tag = 'scoped memory for tpu_custom_call.1']
    #allocation7 [shape = 'u8[65536]{0}', space=vmem, size = 0x10000, scoped, tag = 'input window, operand 3, single buffered']
    #allocation8 [shape = 'u8[4096]{0}', space=vmem, size = 0x1000, scoped, tag = 'output window, operand 0, single buffered']
    %10 = vsyncpa [#allocation3], 0
    %11 = vsyncpa [#allocation6], 0
    %12 = vsyncpa [#allocation4], 0
    // Predicated region
    $region2: #{tpu_custom_call.1} parent=1 // pred_check
      _
    $region3: #{tpu_custom_call.1} parent=1 // pred_check_branch
      %14 = sbr.rel (0) target = $region5
    $region4: #{tpu_custom_call.1} parent=1 // pred_region
      %16 = vsyncadd [#allocation3], 0
      %s18 = sshll.u32 %s0, 4
      %s19 = int_to_ptr.hbm [resolvable:$true] %s18
      %s20 = sshll.u32 [#allocation2], 4
      %s21 = int_to_ptr.vmem [resolvable:$true] %s20
      %23 = dma.hbm_to_vmem [thread:$0]  %s19, 128, %s21, [#allocation3]
    $region5: #{tpu_custom_call.1} parent=1 // pred_fallthru
      _
    // Predicated region
    $region6: #{tpu_custom_call.1} parent=1 // pred_check
      _
    $region7: #{tpu_custom_call.1} parent=1 // pred_check_branch
      %25 = sbr.rel (0) target = $region9
    $region8: #{tpu_custom_call.1} parent=1 // pred_region
      %27 = vsyncadd [#allocation6], 0
      %s28 = sshll.u32 %s1, 4
      %s29 = int_to_ptr.hbm [resolvable:$true] %s28
      %s30 = sshll.u32 [#allocation5], 4
      %s31 = int_to_ptr.vmem [resolvable:$true] %s30
      %36 = dma.hbm_to_vmem [thread:$0]  %s29, 1024, %s31, [#allocation6], 128, 128, 8
    $region9: #{tpu_custom_call.1} parent=1 // pred_fallthru
      _
    // Predicated region
    $region10: #{tpu_custom_call.1} parent=1 // pred_check
      _
    $region11: #{tpu_custom_call.1} parent=1 // pred_check_branch
      %38 = sbr.rel (0) target = $region13
    $region12: #{tpu_custom_call.1} parent=1 // pred_region
      _
    $region13: #{tpu_custom_call.1} parent=1 // pred_fallthru
      _
    // Predicated region
    $region14: #{tpu_custom_call.1} parent=1 // pred_check
      _
    $region15: #{tpu_custom_call.1} parent=1 // pred_check_branch
      %40 = sbr.rel (0) target = $region17
    $region16: #{tpu_custom_call.1} parent=1 // pred_region
      %42 = vsyncadd [#allocation6], 0
      %s43 = sshll.u32 %s3, 4
      %s44 = int_to_ptr.hbm [resolvable:$true] %s43
      %s45 = sshll.u32 [#allocation7], 4
      %s46 = int_to_ptr.vmem [resolvable:$true] %s45
      %51 = dma.hbm_to_vmem [thread:$0]  %s44, 2048, %s46, [#allocation6], 128, 128, 8
    $region17: #{tpu_custom_call.1} parent=1 // pred_fallthru
      _
    // Predicated region
    $region18: #{tpu_custom_call.1} parent=1 // pred_check
      _
    $region19: #{tpu_custom_call.1} parent=1 // pred_check_branch
      %53 = sbr.rel (0) target = $region21
    $region20: #{tpu_custom_call.1} parent=1 // pred_region
      _
    $region21: #{tpu_custom_call.1} parent=1 // pred_fallthru
      _
    // Predicated region
    $region22: #{tpu_custom_call.1} parent=1 // pred_check
      _
    $region23: #{tpu_custom_call.1} parent=1 // pred_check_branch
      %55 = sbr.rel (0) target = $region25
    $region24: #{tpu_custom_call.1} parent=1 // pred_region
      %57 = dma.done [#allocation3], 128
    $region25: #{tpu_custom_call.1} parent=1 // pred_fallthru
      _
    // Predicated region
    $region26: #{tpu_custom_call.1} parent=1 // pred_check
      _
    $region27: #{tpu_custom_call.1} parent=1 // pred_check_branch
      %59 = sbr.rel (0) target = $region29
    $region28: #{tpu_custom_call.1} parent=1 // pred_region
      %61 = dma.done [#allocation6], 1024
    $region29: #{tpu_custom_call.1} parent=1 // pred_fallthru
      _
    // Predicated region
    $region30: #{tpu_custom_call.1} parent=1 // pred_check
      _
    $region31: #{tpu_custom_call.1} parent=1 // pred_check_branch
      %63 = sbr.rel (0) target = $region33
    $region32: #{tpu_custom_call.1} parent=1 // pred_region
      %65 = dma.done [#allocation6], 2048
    $region33: #{tpu_custom_call.1} parent=1 // pred_fallthru
      _
    %v66 = vld [vmem:[#allocation2] sm:$0xff]
    %v67 = vld [vmem:[#allocation5] sm:$0xff]
    %v68 = vld [vmem:[#allocation5 + $0x8] sm:$0xff]
    %v69 = vld [vmem:[#allocation5 + $0x10] sm:$0xff]
    %v70 = vld [vmem:[#allocation5 + $0x18] sm:$0xff]
    %v71 = vld [vmem:[#allocation5 + $0x20] sm:$0xff]
    %v72 = vld [vmem:[#allocation5 + $0x28] sm:$0xff]
    %v73 = vld [vmem:[#allocation5 + $0x30] sm:$0xff]
    %v74 = vld [vmem:[#allocation5 + $0x38] sm:$0xff]
    %v75 = vld [vmem:[%s2] sm:$0x1]
    %v77 = vperm.slane %v75, 0
    %vm79 = vcmask 523264
    %v81 = vsel %vm79, %v66, 0
    %83 = vmatpush.msra.mxu0 0.0
    %84 = vmatpush.msra.mxu0 0.0
    %85 = vmatpush.msra.mxu0 0.0
    %86 = vmatpush.msra.mxu0 0.0
    %87 = vmatpush.msra.mxu0 0.0
    %88 = vmatpush.msra.mxu0 0.0
    %89 = vmatpush.msra.mxu0 0.0
    %90 = vmatpush.msra.mxu0 0.0
    %91 = vmatpush.msra.mxu0 %v74
    %92 = vmatpush.msra.mxu0 %v73
    %93 = vmatpush.msra.mxu0 %v72
    %94 = vmatpush.msra.mxu0 %v71
    %95 = vmatpush.msra.mxu0 %v70
    %96 = vmatpush.msra.mxu0 %v69
    %97 = vmatpush.msra.mxu0 %v68
    %98 = vmatpush.msra.mxu0 %v67
    %99 = vmatmul.f32.gmra.mxu0 %v81
    %v100 = vpop.f32.mrf.mxu0
    %v101 = vadd.f32 %v77, %v100
    %102 = vdwg.mxu0
    %v103 = vmax.f32 %v101, 0.0
    %v104 = vld [vmem:[#allocation7] sm:$0xff]
    %v105 = vld [vmem:[#allocation7 + $0x8] sm:$0xff]
    %v106 = vld [vmem:[#allocation7 + $0x10] sm:$0xff]
    %v107 = vld [vmem:[#allocation7 + $0x18] sm:$0xff]
    %v108 = vld [vmem:[#allocation7 + $0x20] sm:$0xff]
    %v109 = vld [vmem:[#allocation7 + $0x28] sm:$0xff]
    %v110 = vld [vmem:[#allocation7 + $0x30] sm:$0xff]
    %v111 = vld [vmem:[#allocation7 + $0x38] sm:$0xff]
    %v112 = vld [vmem:[#allocation7 + $0x40] sm:$0xff]
    %v113 = vld [vmem:[#allocation7 + $0x48] sm:$0xff]
    %v114 = vld [vmem:[#allocation7 + $0x50] sm:$0xff]
    %v115 = vld [vmem:[#allocation7 + $0x58] sm:$0xff]
    %v116 = vld [vmem:[#allocation7 + $0x60] sm:$0xff]
    %v117 = vld [vmem:[#allocation7 + $0x68] sm:$0xff]
    %v118 = vld [vmem:[#allocation7 + $0x70] sm:$0xff]
    %v119 = vld [vmem:[#allocation7 + $0x78] sm:$0xff]
    %v120 = vld [vmem:[%s4] sm:$0x1]
    %v122 = vperm.slane %v120, 0
    %124 = vmatpush.msra.mxu0 %v119
    %125 = vmatpush.msra.mxu0 %v118
    %126 = vmatpush.msra.mxu0 %v117
    %127 = vmatpush.msra.mxu0 %v116
    %128 = vmatpush.msra.mxu0 %v115
    %129 = vmatpush.msra.mxu0 %v114
    %130 = vmatpush.msra.mxu0 %v113
    %131 = vmatpush.msra.mxu0 %v112
    %132 = vmatpush.msra.mxu0 %v111
    %133 = vmatpush.msra.mxu0 %v110
    %134 = vmatpush.msra.mxu0 %v109
    %135 = vmatpush.msra.mxu0 %v108
    %136 = vmatpush.msra.mxu0 %v107
    %137 = vmatpush.msra.mxu0 %v106
    %138 = vmatpush.msra.mxu0 %v105
    %139 = vmatpush.msra.mxu0 %v104
    %140 = vmatmul.f32.gmra.mxu0 %v103
    %v141 = vpop.f32.mrf.mxu0
    %v142 = vadd.f32 %v122, %v141
    %143 = vdwg.mxu0
    %144 = vst [vmem:[#allocation8] sm:$0xff] %v142
    // Predicated region
    $region34: #{tpu_custom_call.1} parent=1 // pred_check
      _
    $region35: #{tpu_custom_call.1} parent=1 // pred_check_branch
      %146 = sbr.rel (0) target = $region37
    $region36: #{tpu_custom_call.1} parent=1 // pred_region
      %148 = vsyncadd [#allocation4], 0
      %s150 = sshll.u32 [#allocation8], 4
      %s151 = int_to_ptr.vmem [resolvable:$true] %s150
      %s152 = sshll.u32 %s5, 4
      %s153 = int_to_ptr.hbm [resolvable:$true] %s152
      %155 = dma.vmem_to_hbm [thread:$0]  %s151, 128, %s153, [#allocation4]
    $region37: #{tpu_custom_call.1} parent=1 // pred_fallthru
      _
    // Predicated region
    $region38: #{tpu_custom_call.1} parent=1 // pred_check
      _
    $region39: #{tpu_custom_call.1} parent=1 // pred_check_branch
      %157 = sbr.rel (0) target = $region41
    $region40: #{tpu_custom_call.1} parent=1 // pred_region
      %159 = dma.done [#allocation4], 128
    $region41: #{tpu_custom_call.1} parent=1 // pred_fallthru
      _
    %160 = vsyncpa [#allocation3], 1
    %161 = vsyncpa [#allocation6], 1
    %162 = vsyncpa [#allocation4], 1

</llo_original>
